<compile_context>
chip_gen: v7x
topology: tpu7x:2x2x1
jax: 0.10.0
libtpu: 0.0.40
codegen_flags: <defaults>
</compile_context>

<pallas_src>
import functools

import jax
import jax.numpy as jnp
from jax.experimental import pallas as pl
from jax.experimental.pallas import tpu as pltpu


# ----------------------------- fused TemporalBlock kernel -----------------------------

def _temporal_block_kernel(*refs, ksize, dilation, padding, has_down):
    if has_down:
        (x_ref, w1_ref, b1_ref, w2_ref, b2_ref, wd_ref, bd_ref,
         o_ref, pad1_ref, h1_ref) = refs
    else:
        (x_ref, w1_ref, b1_ref, w2_ref, b2_ref,
         o_ref, pad1_ref, h1_ref) = refs
        wd_ref = bd_ref = None

    n, L, _ = x_ref.shape
    c_out = o_ref.shape[2]
    K, d, P = ksize, dilation, padding
    l1 = L + P  # conv1 output length (== length of h1)

    # hoist bias loads / broadcasts out of the batch loop
    b1 = b1_ref[...]                                     # (1, C_out)
    b2 = b2_ref[...]
    bd = bd_ref[...] if has_down else None

    for b in range(n):                                   # static unroll (tiny batch)
        # ---- circular pad of x built directly in VMEM scratch ----
        if P > 0:
            pad1_ref[pl.ds(0, P), :] = x_ref[b, pl.ds(L - P, P), :]
        pad1_ref[pl.ds(P, L), :] = x_ref[b]
        if P > 0:
            pad1_ref[pl.ds(P + L, P), :] = x_ref[b, pl.ds(0, P), :]

        # ---- dilated conv1 + bias + ReLU (K static taps on the MXU) ----
        acc1 = jnp.zeros((l1, c_out), jnp.float32)
        for j in range(K):
            acc1 = acc1 + jnp.dot(pad1_ref[pl.ds(j * d, l1), :], w1_ref[j],
                                  preferred_element_type=jnp.float32)
        h1_ref[...] = jnp.maximum(acc1 + b1, 0.0)
        # dropout1: identity in eval mode

        # ---- dilated conv2 + bias + ReLU, fused with the chomp slice:
        #      rows [P:P+L] of pad(h1)*w2 only ever read h1[r + j*d], so compute
        #      exactly those L rows (bitwise identical to pad -> conv -> slice) ----
        acc2 = jnp.zeros((L, c_out), jnp.float32)
        for j in range(K):
            acc2 = acc2 + jnp.dot(h1_ref[pl.ds(j * d, L), :], w2_ref[j],
                                  preferred_element_type=jnp.float32)
        out = jnp.maximum(acc2 + b2, 0.0)
        # dropout2: identity in eval mode

        # ---- residual (optional 1x1 downsample) + final ReLU epilogue ----
        if has_down:
            res = jnp.dot(x_ref[b], wd_ref[0],
                          preferred_element_type=jnp.float32) + bd
        else:
            res = x_ref[b].astype(jnp.float32)
        o_ref[b] = jnp.maximum(out + res, 0.0).astype(o_ref.dtype)


def temporal_block_forward(x, p, *, ksize, dilation, padding):
    """x: (N, L, C_in) -> (N, L, C_out), fully fused TemporalBlock."""
    n, L, c_in = x.shape
    c_out = p["b1"].shape[0]
    K, d, P = ksize, dilation, padding
    l1 = L + P
    has_down = "wd" in p

    args = [x, p["w1"], p["b1"].reshape(1, c_out),
            p["w2"], p["b2"].reshape(1, c_out)]
    in_specs = [
        pl.BlockSpec((n, L, c_in), lambda i: (0, 0, 0)),
        pl.BlockSpec((K, c_in, c_out), lambda i: (0, 0, 0)),
        pl.BlockSpec((1, c_out), lambda i: (0, 0)),
        pl.BlockSpec((K, c_out, c_out), lambda i: (0, 0, 0)),
        pl.BlockSpec((1, c_out), lambda i: (0, 0)),
    ]
    flops = n * (2 * l1 * K * c_in * c_out + 2 * L * K * c_out * c_out)
    bytes_accessed = 4 * (int(x.size) + int(p["w1"].size) + int(p["w2"].size)
                          + 2 * c_out + n * L * c_out)
    if has_down:
        args += [p["wd"], p["bd"].reshape(1, c_out)]
        in_specs += [pl.BlockSpec((1, c_in, c_out), lambda i: (0, 0, 0)),
                     pl.BlockSpec((1, c_out), lambda i: (0, 0))]
        flops += n * 2 * L * c_in * c_out
        bytes_accessed += 4 * (int(p["wd"].size) + c_out)

    kern = functools.partial(_temporal_block_kernel, ksize=K, dilation=d,
                             padding=P, has_down=has_down)
    return pl.pallas_call(
        kern,
        out_shape=jax.ShapeDtypeStruct((n, L, c_out), x.dtype),
        grid=(1,),
        in_specs=in_specs,
        out_specs=pl.BlockSpec((n, L, c_out), lambda i: (0, 0, 0)),
        scratch_shapes=[pltpu.VMEM((L + 2 * P, c_in), jnp.float32),   # circ-padded x
                        pltpu.VMEM((l1, c_out), jnp.float32)],        # h1 (conv1 output)
        compiler_params=pltpu.CompilerParams(dimension_semantics=("arbitrary",)),
        cost_estimate=pl.CostEstimate(flops=flops, transcendentals=0,
                                      bytes_accessed=bytes_accessed),
    )(*args)


def temporal_conv_net(x, params, ksize):
    for i, p in enumerate(params):
        d = 2 ** i
        d = int(168 / ksize) if ksize * d > 168 else d
        P = (ksize - 1) * d
        x = temporal_block_forward(x, p, ksize=ksize, dilation=d, padding=P)
    return x


# ----------------------------- JAX glue (params / weight_norm folding) -----------------------------

def circular_pad(x, p):
    """PyTorch F.pad(..., (p, p), mode='circular') along time axis of (N, L, C). (reference only)"""
    if p == 0:
        return x
    return jnp.concatenate([x[:, -p:, :], x, x[:, :p, :]], axis=1)


def weight_norm_effective(v, g):
    """v: (C_out, C_in, K) PyTorch layout, g: (C_out,). Return (K, C_in, C_out)."""
    norm = jnp.sqrt(jnp.sum(v * v, axis=(1, 2), keepdims=True))
    w = g.reshape(-1, 1, 1) * v / norm
    return jnp.transpose(w, (2, 1, 0))


def init_block_params(key, c_in, c_out, ksize):
    ks = jax.random.split(key, 8)
    v1 = 0.01 * jax.random.normal(ks[0], (c_out, c_in, ksize), jnp.float32)
    g1 = 1.0 + 0.1 * jax.random.normal(ks[1], (c_out,), jnp.float32)
    b1 = 0.05 * jax.random.normal(ks[2], (c_out,), jnp.float32)
    v2 = 0.01 * jax.random.normal(ks[3], (c_out, c_out, ksize), jnp.float32)
    g2 = 1.0 + 0.1 * jax.random.normal(ks[4], (c_out,), jnp.float32)
    b2 = 0.05 * jax.random.normal(ks[5], (c_out,), jnp.float32)
    p = {
        "w1": weight_norm_effective(v1, g1), "b1": b1,
        "w2": weight_norm_effective(v2, g2), "b2": b2,
    }
    if c_in != c_out:  # downsample 1x1 conv (plain nn.Conv1d, no weight_norm)
        wd = 0.01 * jax.random.normal(ks[6], (c_out, c_in, 1), jnp.float32)
        bd = 0.05 * jax.random.normal(ks[7], (c_out,), jnp.float32)
        p["wd"] = jnp.transpose(wd, (2, 1, 0))  # (1, C_in, C_out)
        p["bd"] = bd
    return p


# ----------------------------- pure-JAX reference (for self-check) -----------------------------

def _conv_ref(x_pad, w, b, dilation, relu):
    k = w.shape[0]
    l_out = x_pad.shape[1] - dilation * (k - 1)
    out = sum(jnp.einsum("nlc,cd->nld",
                         x_pad[:, j * dilation:j * dilation + l_out, :], w[j])
              for j in range(k)) + b
    return jnp.maximum(out, 0.0) if relu else out


def _net_ref(x, params, ksize):
    for i, p in enumerate(params):
        d = 2 ** i
        d = int(168 / ksize) if ksize * d > 168 else d
        P = (ksize - 1) * d
        n, L, _ = x.shape
        h = _conv_ref(circular_pad(x, P), p["w1"], p["b1"], d, True)
        h = _conv_ref(circular_pad(h, P), p["w2"], p["b2"], d, True)
        out = h[:, P:P + L, :]
        res = _conv_ref(x, p["wd"], p["bd"], 1, False) if "wd" in p else x
        x = jnp.maximum(out + res, 0.0)
    return x


# ----------------------------- main -----------------------------

if __name__ == "__main__":
    key = jax.random.PRNGKey(0)
    N, C_IN, L = 2, 4, 16
    NUM_CHANNELS = [8, 8, 16]
    KSIZE = 2

    key, xkey = jax.random.split(key)
    x_ncl = jax.random.normal(xkey, (N, C_IN, L), jnp.float32)   # PyTorch NCL input
    x = jnp.transpose(x_ncl, (0, 2, 1))                          # -> (N, L, C) kernel layout

    params = []
    in_ch = C_IN
    for out_ch in NUM_CHANNELS:
        key, bkey = jax.random.split(key)
        params.append(init_block_params(bkey, in_ch, out_ch, KSIZE))
        in_ch = out_ch

    out = temporal_conv_net(x, params, KSIZE)
    out = jax.block_until_ready(out)

    ref = _net_ref(x, params, KSIZE)
    assert out.shape == (N, L, NUM_CHANNELS[-1]), out.shape
    assert jnp.allclose(out, ref, atol=1e-5, rtol=1e-5), float(jnp.max(jnp.abs(out - ref)))
    print("KERNEL_OK")
</pallas_src>

<mosaic_0001>
module attributes {stable_mosaic.version = 11 : i64} {
  func.func @_temporal_block_kernel(%arg0: i32, %arg1: memref<2x16x4xf32, #tpu.memory_space<vmem>>, %arg2: memref<2x4x8xf32, #tpu.memory_space<vmem>>, %arg3: memref<1x8xf32, #tpu.memory_space<vmem>>, %arg4: memref<2x8x8xf32, #tpu.memory_space<vmem>>, %arg5: memref<1x8xf32, #tpu.memory_space<vmem>>, %arg6: memref<1x4x8xf32, #tpu.memory_space<vmem>>, %arg7: memref<1x8xf32, #tpu.memory_space<vmem>>, %arg8: memref<2x16x8xf32, #tpu.memory_space<vmem>>, %arg9: memref<18x4xf32, #tpu.memory_space<vmem>>, %arg10: memref<17x8xf32, #tpu.memory_space<vmem>>) attributes {dimension_semantics = [#tpu.dimension_semantics<arbitrary>], iteration_bounds = array<i64: 1>, scalar_prefetch = 0 : i64, scratch_operands = 2 : i64, tpu.core_type = #tpu.core_type<tc>, window_params = [{pipeline_mode = #tpu.pipeline_mode<synchronous>, transform_indices = @transform_0, window_bounds = array<i64: 2, 16, 4>}, {pipeline_mode = #tpu.pipeline_mode<synchronous>, transform_indices = @transform_1, window_bounds = array<i64: 2, 4, 8>}, {pipeline_mode = #tpu.pipeline_mode<synchronous>, transform_indices = @transform_2, window_bounds = array<i64: 1, 8>}, {pipeline_mode = #tpu.pipeline_mode<synchronous>, transform_indices = @transform_3, window_bounds = array<i64: 2, 8, 8>}, {pipeline_mode = #tpu.pipeline_mode<synchronous>, transform_indices = @transform_4, window_bounds = array<i64: 1, 8>}, {pipeline_mode = #tpu.pipeline_mode<synchronous>, transform_indices = @transform_5, window_bounds = array<i64: 1, 4, 8>}, {pipeline_mode = #tpu.pipeline_mode<synchronous>, transform_indices = @transform_6, window_bounds = array<i64: 1, 8>}, {pipeline_mode = #tpu.pipeline_mode<synchronous>, transform_indices = @transform_7, window_bounds = array<i64: 2, 16, 8>}]} {
    %c0 = arith.constant 0 : index
    %c0_0 = arith.constant 0 : index
    %0 = vector.load %arg3[%c0, %c0_0] : memref<1x8xf32, #tpu.memory_space<vmem>>, vector<1x8xf32>
    %c0_1 = arith.constant 0 : index
    %c0_2 = arith.constant 0 : index
    %1 = vector.load %arg5[%c0_1, %c0_2] : memref<1x8xf32, #tpu.memory_space<vmem>>, vector<1x8xf32>
    %c0_3 = arith.constant 0 : index
    %c0_4 = arith.constant 0 : index
    %2 = vector.load %arg7[%c0_3, %c0_4] : memref<1x8xf32, #tpu.memory_space<vmem>>, vector<1x8xf32>
    %c0_5 = arith.constant 0 : index
    %c15 = arith.constant 15 : index
    %c0_6 = arith.constant 0 : index
    %3 = vector.load %arg1[%c0_5, %c15, %c0_6] : memref<2x16x4xf32, #tpu.memory_space<vmem>>, vector<1x1x4xf32>
    %4 = vector.shape_cast %3 : vector<1x1x4xf32> to vector<1x4xf32>
    %c0_7 = arith.constant 0 : index
    %c0_8 = arith.constant 0 : index
    %5 = vector.load %arg9[%c0_7, %c0_8] : memref<18x4xf32, #tpu.memory_space<vmem>>, vector<1x4xf32>
    tpu.vector_store %arg9[%c0_7, %c0_8], %4 {strides = array<i32>} : memref<18x4xf32, #tpu.memory_space<vmem>>, vector<1x4xf32>,
    %c0_9 = arith.constant 0 : index
    %c0_10 = arith.constant 0 : index
    %c0_11 = arith.constant 0 : index
    %6 = vector.load %arg1[%c0_9, %c0_10, %c0_11] : memref<2x16x4xf32, #tpu.memory_space<vmem>>, vector<1x16x4xf32>
    %7 = vector.shape_cast %6 : vector<1x16x4xf32> to vector<16x4xf32>
    %c1 = arith.constant 1 : index
    %c0_12 = arith.constant 0 : index
    %8 = vector.load %arg9[%c1, %c0_12] : memref<18x4xf32, #tpu.memory_space<vmem>>, vector<16x4xf32>
    tpu.vector_store %arg9[%c1, %c0_12], %7 {strides = array<i32>} : memref<18x4xf32, #tpu.memory_space<vmem>>, vector<16x4xf32>,
    %c0_13 = arith.constant 0 : index
    %c0_14 = arith.constant 0 : index
    %c0_15 = arith.constant 0 : index
    %9 = vector.load %arg1[%c0_13, %c0_14, %c0_15] : memref<2x16x4xf32, #tpu.memory_space<vmem>>, vector<1x1x4xf32>
    %10 = vector.shape_cast %9 : vector<1x1x4xf32> to vector<1x4xf32>
    %c17 = arith.constant 17 : index
    %c0_16 = arith.constant 0 : index
    %11 = vector.load %arg9[%c17, %c0_16] : memref<18x4xf32, #tpu.memory_space<vmem>>, vector<1x4xf32>
    tpu.vector_store %arg9[%c17, %c0_16], %10 {strides = array<i32>} : memref<18x4xf32, #tpu.memory_space<vmem>>, vector<1x4xf32>,
    %cst = arith.constant 0.000000e+00 : f32
    %12 = vector.broadcast %cst : f32 to vector<17x8xf32>
    %c0_17 = arith.constant 0 : index
    %c0_18 = arith.constant 0 : index
    %13 = vector.load %arg9[%c0_17, %c0_18] : memref<18x4xf32, #tpu.memory_space<vmem>>, vector<17x4xf32>
    %c0_19 = arith.constant 0 : index
    %c0_20 = arith.constant 0 : index
    %c0_21 = arith.constant 0 : index
    %14 = vector.load %arg2[%c0_19, %c0_20, %c0_21] : memref<2x4x8xf32, #tpu.memory_space<vmem>>, vector<1x4x8xf32>
    %15 = vector.shape_cast %14 : vector<1x4x8xf32> to vector<4x8xf32>
    %cst_22 = arith.constant dense<0.000000e+00> : vector<17x8xf32>
    %16 = tpu.matmul %13, %15, %cst_22 {dimension_numbers = #tpu.dot_dimension_numbers<[1], [0], [0], [1], [0, 0, 1, 1], [], []>} : vector<17x4xf32>, vector<4x8xf32>, vector<17x8xf32> -> vector<17x8xf32>
    %17 = arith.addf %12, %16 : vector<17x8xf32>
    %c1_23 = arith.constant 1 : index
    %c0_24 = arith.constant 0 : index
    %18 = vector.load %arg9[%c1_23, %c0_24] : memref<18x4xf32, #tpu.memory_space<vmem>>, vector<17x4xf32>
    %c1_25 = arith.constant 1 : index
    %c0_26 = arith.constant 0 : index
    %c0_27 = arith.constant 0 : index
    %19 = vector.load %arg2[%c1_25, %c0_26, %c0_27] : memref<2x4x8xf32, #tpu.memory_space<vmem>>, vector<1x4x8xf32>
    %20 = vector.shape_cast %19 : vector<1x4x8xf32> to vector<4x8xf32>
    %cst_28 = arith.constant dense<0.000000e+00> : vector<17x8xf32>
    %21 = tpu.matmul %18, %20, %cst_28 {dimension_numbers = #tpu.dot_dimension_numbers<[1], [0], [0], [1], [0, 0, 1, 1], [], []>} : vector<17x4xf32>, vector<4x8xf32>, vector<17x8xf32> -> vector<17x8xf32>
    %22 = arith.addf %17, %21 : vector<17x8xf32>
    %23 = vector.broadcast %0 : vector<1x8xf32> to vector<17x8xf32>
    %24 = arith.addf %22, %23 : vector<17x8xf32>
    %cst_29 = arith.constant 0.000000e+00 : f32
    %25 = vector.broadcast %cst_29 : f32 to vector<17x8xf32>
    %26 = arith.maximumf %24, %25 : vector<17x8xf32>
    %c0_30 = arith.constant 0 : index
    %c0_31 = arith.constant 0 : index
    %27 = vector.load %arg10[%c0_30, %c0_31] : memref<17x8xf32, #tpu.memory_space<vmem>>, vector<17x8xf32>
    tpu.vector_store %arg10[%c0_30, %c0_31], %26 {strides = array<i32>} : memref<17x8xf32, #tpu.memory_space<vmem>>, vector<17x8xf32>,
    %cst_32 = arith.constant 0.000000e+00 : f32
    %28 = vector.broadcast %cst_32 : f32 to vector<16x8xf32>
    %c0_33 = arith.constant 0 : index
    %c0_34 = arith.constant 0 : index
    %29 = vector.load %arg10[%c0_33, %c0_34] : memref<17x8xf32, #tpu.memory_space<vmem>>, vector<16x8xf32>
    %c0_35 = arith.constant 0 : index
    %c0_36 = arith.constant 0 : index
    %c0_37 = arith.constant 0 : index
    %30 = vector.load %arg4[%c0_35, %c0_36, %c0_37] : memref<2x8x8xf32, #tpu.memory_space<vmem>>, vector<1x8x8xf32>
    %31 = vector.shape_cast %30 : vector<1x8x8xf32> to vector<8x8xf32>
    %cst_38 = arith.constant dense<0.000000e+00> : vector<16x8xf32>
    %32 = tpu.matmul %29, %31, %cst_38 {dimension_numbers = #tpu.dot_dimension_numbers<[1], [0], [0], [1], [0, 0, 1, 1], [], []>} : vector<16x8xf32>, vector<8x8xf32>, vector<16x8xf32> -> vector<16x8xf32>
    %33 = arith.addf %28, %32 : vector<16x8xf32>
    %c1_39 = arith.constant 1 : index
    %c0_40 = arith.constant 0 : index
    %34 = vector.load %arg10[%c1_39, %c0_40] : memref<17x8xf32, #tpu.memory_space<vmem>>, vector<16x8xf32>
    %c1_41 = arith.constant 1 : index
    %c0_42 = arith.constant 0 : index
    %c0_43 = arith.constant 0 : index
    %35 = vector.load %arg4[%c1_41, %c0_42, %c0_43] : memref<2x8x8xf32, #tpu.memory_space<vmem>>, vector<1x8x8xf32>
    %36 = vector.shape_cast %35 : vector<1x8x8xf32> to vector<8x8xf32>
    %cst_44 = arith.constant dense<0.000000e+00> : vector<16x8xf32>
    %37 = tpu.matmul %34, %36, %cst_44 {dimension_numbers = #tpu.dot_dimension_numbers<[1], [0], [0], [1], [0, 0, 1, 1], [], []>} : vector<16x8xf32>, vector<8x8xf32>, vector<16x8xf32> -> vector<16x8xf32>
    %38 = arith.addf %33, %37 : vector<16x8xf32>
    %39 = vector.broadcast %1 : vector<1x8xf32> to vector<16x8xf32>
    %40 = arith.addf %38, %39 : vector<16x8xf32>
    %cst_45 = arith.constant 0.000000e+00 : f32
    %41 = vector.broadcast %cst_45 : f32 to vector<16x8xf32>
    %42 = arith.maximumf %40, %41 : vector<16x8xf32>
    %c0_46 = arith.constant 0 : index
    %c0_47 = arith.constant 0 : index
    %c0_48 = arith.constant 0 : index
    %43 = vector.load %arg1[%c0_46, %c0_47, %c0_48] : memref<2x16x4xf32, #tpu.memory_space<vmem>>, vector<1x16x4xf32>
    %44 = vector.shape_cast %43 : vector<1x16x4xf32> to vector<16x4xf32>
    %c0_49 = arith.constant 0 : index
    %c0_50 = arith.constant 0 : index
    %c0_51 = arith.constant 0 : index
    %45 = vector.load %arg6[%c0_49, %c0_50, %c0_51] : memref<1x4x8xf32, #tpu.memory_space<vmem>>, vector<1x4x8xf32>
    %46 = vector.shape_cast %45 : vector<1x4x8xf32> to vector<4x8xf32>
    %cst_52 = arith.constant dense<0.000000e+00> : vector<16x8xf32>
    %47 = tpu.matmul %44, %46, %cst_52 {dimension_numbers = #tpu.dot_dimension_numbers<[1], [0], [0], [1], [0, 0, 1, 1], [], []>} : vector<16x4xf32>, vector<4x8xf32>, vector<16x8xf32> -> vector<16x8xf32>
    %48 = vector.broadcast %2 : vector<1x8xf32> to vector<16x8xf32>
    %49 = arith.addf %47, %48 : vector<16x8xf32>
    %50 = arith.addf %42, %49 : vector<16x8xf32>
    %cst_53 = arith.constant 0.000000e+00 : f32
    %51 = vector.broadcast %cst_53 : f32 to vector<16x8xf32>
    %52 = arith.maximumf %50, %51 : vector<16x8xf32>
    %c0_54 = arith.constant 0 : index
    %c0_55 = arith.constant 0 : index
    %c0_56 = arith.constant 0 : index
    %53 = vector.load %arg8[%c0_54, %c0_55, %c0_56] : memref<2x16x8xf32, #tpu.memory_space<vmem>>, vector<1x16x8xf32>
    %54 = vector.shape_cast %53 : vector<1x16x8xf32> to vector<16x8xf32>
    %55 = vector.shape_cast %52 : vector<16x8xf32> to vector<1x16x8xf32>
    tpu.vector_store %arg8[%c0_54, %c0_55, %c0_56], %55 {strides = array<i32>} : memref<2x16x8xf32, #tpu.memory_space<vmem>>, vector<1x16x8xf32>,
    %c1_57 = arith.constant 1 : index
    %c15_58 = arith.constant 15 : index
    %c0_59 = arith.constant 0 : index
    %56 = vector.load %arg1[%c1_57, %c15_58, %c0_59] : memref<2x16x4xf32, #tpu.memory_space<vmem>>, vector<1x1x4xf32>
    %57 = vector.shape_cast %56 : vector<1x1x4xf32> to vector<1x4xf32>
    %c0_60 = arith.constant 0 : index
    %c0_61 = arith.constant 0 : index
    %58 = vector.load %arg9[%c0_60, %c0_61] : memref<18x4xf32, #tpu.memory_space<vmem>>, vector<1x4xf32>
    tpu.vector_store %arg9[%c0_60, %c0_61], %57 {strides = array<i32>} : memref<18x4xf32, #tpu.memory_space<vmem>>, vector<1x4xf32>,
    %c1_62 = arith.constant 1 : index
    %c0_63 = arith.constant 0 : index
    %c0_64 = arith.constant 0 : index
    %59 = vector.load %arg1[%c1_62, %c0_63, %c0_64] : memref<2x16x4xf32, #tpu.memory_space<vmem>>, vector<1x16x4xf32>
    %60 = vector.shape_cast %59 : vector<1x16x4xf32> to vector<16x4xf32>
    %c1_65 = arith.constant 1 : index
    %c0_66 = arith.constant 0 : index
    %61 = vector.load %arg9[%c1_65, %c0_66] : memref<18x4xf32, #tpu.memory_space<vmem>>, vector<16x4xf32>
    tpu.vector_store %arg9[%c1_65, %c0_66], %60 {strides = array<i32>} : memref<18x4xf32, #tpu.memory_space<vmem>>, vector<16x4xf32>,
    %c1_67 = arith.constant 1 : index
    %c0_68 = arith.constant 0 : index
    %c0_69 = arith.constant 0 : index
    %62 = vector.load %arg1[%c1_67, %c0_68, %c0_69] : memref<2x16x4xf32, #tpu.memory_space<vmem>>, vector<1x1x4xf32>
    %63 = vector.shape_cast %62 : vector<1x1x4xf32> to vector<1x4xf32>
    %c17_70 = arith.constant 17 : index
    %c0_71 = arith.constant 0 : index
    %64 = vector.load %arg9[%c17_70, %c0_71] : memref<18x4xf32, #tpu.memory_space<vmem>>, vector<1x4xf32>
    tpu.vector_store %arg9[%c17_70, %c0_71], %63 {strides = array<i32>} : memref<18x4xf32, #tpu.memory_space<vmem>>, vector<1x4xf32>,
    %cst_72 = arith.constant 0.000000e+00 : f32
    %65 = vector.broadcast %cst_72 : f32 to vector<17x8xf32>
    %c0_73 = arith.constant 0 : index
    %c0_74 = arith.constant 0 : index
    %66 = vector.load %arg9[%c0_73, %c0_74] : memref<18x4xf32, #tpu.memory_space<vmem>>, vector<17x4xf32>
    %c0_75 = arith.constant 0 : index
    %c0_76 = arith.constant 0 : index
    %c0_77 = arith.constant 0 : index
    %67 = vector.load %arg2[%c0_75, %c0_76, %c0_77] : memref<2x4x8xf32, #tpu.memory_space<vmem>>, vector<1x4x8xf32>
    %68 = vector.shape_cast %67 : vector<1x4x8xf32> to vector<4x8xf32>
    %cst_78 = arith.constant dense<0.000000e+00> : vector<17x8xf32>
    %69 = tpu.matmul %66, %68, %cst_78 {dimension_numbers = #tpu.dot_dimension_numbers<[1], [0], [0], [1], [0, 0, 1, 1], [], []>} : vector<17x4xf32>, vector<4x8xf32>, vector<17x8xf32> -> vector<17x8xf32>
    %70 = arith.addf %65, %69 : vector<17x8xf32>
    %c1_79 = arith.constant 1 : index
    %c0_80 = arith.constant 0 : index
    %71 = vector.load %arg9[%c1_79, %c0_80] : memref<18x4xf32, #tpu.memory_space<vmem>>, vector<17x4xf32>
    %c1_81 = arith.constant 1 : index
    %c0_82 = arith.constant 0 : index
    %c0_83 = arith.constant 0 : index
    %72 = vector.load %arg2[%c1_81, %c0_82, %c0_83] : memref<2x4x8xf32, #tpu.memory_space<vmem>>, vector<1x4x8xf32>
    %73 = vector.shape_cast %72 : vector<1x4x8xf32> to vector<4x8xf32>
    %cst_84 = arith.constant dense<0.000000e+00> : vector<17x8xf32>
    %74 = tpu.matmul %71, %73, %cst_84 {dimension_numbers = #tpu.dot_dimension_numbers<[1], [0], [0], [1], [0, 0, 1, 1], [], []>} : vector<17x4xf32>, vector<4x8xf32>, vector<17x8xf32> -> vector<17x8xf32>
    %75 = arith.addf %70, %74 : vector<17x8xf32>
    %76 = vector.broadcast %0 : vector<1x8xf32> to vector<17x8xf32>
    %77 = arith.addf %75, %76 : vector<17x8xf32>
    %cst_85 = arith.constant 0.000000e+00 : f32
    %78 = vector.broadcast %cst_85 : f32 to vector<17x8xf32>
    %79 = arith.maximumf %77, %78 : vector<17x8xf32>
    %c0_86 = arith.constant 0 : index
    %c0_87 = arith.constant 0 : index
    %80 = vector.load %arg10[%c0_86, %c0_87] : memref<17x8xf32, #tpu.memory_space<vmem>>, vector<17x8xf32>
    tpu.vector_store %arg10[%c0_86, %c0_87], %79 {strides = array<i32>} : memref<17x8xf32, #tpu.memory_space<vmem>>, vector<17x8xf32>,
    %cst_88 = arith.constant 0.000000e+00 : f32
    %81 = vector.broadcast %cst_88 : f32 to vector<16x8xf32>
    %c0_89 = arith.constant 0 : index
    %c0_90 = arith.constant 0 : index
    %82 = vector.load %arg10[%c0_89, %c0_90] : memref<17x8xf32, #tpu.memory_space<vmem>>, vector<16x8xf32>
    %c0_91 = arith.constant 0 : index
    %c0_92 = arith.constant 0 : index
    %c0_93 = arith.constant 0 : index
    %83 = vector.load %arg4[%c0_91, %c0_92, %c0_93] : memref<2x8x8xf32, #tpu.memory_space<vmem>>, vector<1x8x8xf32>
    %84 = vector.shape_cast %83 : vector<1x8x8xf32> to vector<8x8xf32>
    %cst_94 = arith.constant dense<0.000000e+00> : vector<16x8xf32>
    %85 = tpu.matmul %82, %84, %cst_94 {dimension_numbers = #tpu.dot_dimension_numbers<[1], [0], [0], [1], [0, 0, 1, 1], [], []>} : vector<16x8xf32>, vector<8x8xf32>, vector<16x8xf32> -> vector<16x8xf32>
    %86 = arith.addf %81, %85 : vector<16x8xf32>
    %c1_95 = arith.constant 1 : index
    %c0_96 = arith.constant 0 : index
    %87 = vector.load %arg10[%c1_95, %c0_96] : memref<17x8xf32, #tpu.memory_space<vmem>>, vector<16x8xf32>
    %c1_97 = arith.constant 1 : index
    %c0_98 = arith.constant 0 : index
    %c0_99 = arith.constant 0 : index
    %88 = vector.load %arg4[%c1_97, %c0_98, %c0_99] : memref<2x8x8xf32, #tpu.memory_space<vmem>>, vector<1x8x8xf32>
    %89 = vector.shape_cast %88 : vector<1x8x8xf32> to vector<8x8xf32>
    %cst_100 = arith.constant dense<0.000000e+00> : vector<16x8xf32>
    %90 = tpu.matmul %87, %89, %cst_100 {dimension_numbers = #tpu.dot_dimension_numbers<[1], [0], [0], [1], [0, 0, 1, 1], [], []>} : vector<16x8xf32>, vector<8x8xf32>, vector<16x8xf32> -> vector<16x8xf32>
    %91 = arith.addf %86, %90 : vector<16x8xf32>
    %92 = vector.broadcast %1 : vector<1x8xf32> to vector<16x8xf32>
    %93 = arith.addf %91, %92 : vector<16x8xf32>
    %cst_101 = arith.constant 0.000000e+00 : f32
    %94 = vector.broadcast %cst_101 : f32 to vector<16x8xf32>
    %95 = arith.maximumf %93, %94 : vector<16x8xf32>
    %c1_102 = arith.constant 1 : index
    %c0_103 = arith.constant 0 : index
    %c0_104 = arith.constant 0 : index
    %96 = vector.load %arg1[%c1_102, %c0_103, %c0_104] : memref<2x16x4xf32, #tpu.memory_space<vmem>>, vector<1x16x4xf32>
    %97 = vector.shape_cast %96 : vector<1x16x4xf32> to vector<16x4xf32>
    %c0_105 = arith.constant 0 : index
    %c0_106 = arith.constant 0 : index
    %c0_107 = arith.constant 0 : index
    %98 = vector.load %arg6[%c0_105, %c0_106, %c0_107] : memref<1x4x8xf32, #tpu.memory_space<vmem>>, vector<1x4x8xf32>
    %99 = vector.shape_cast %98 : vector<1x4x8xf32> to vector<4x8xf32>
    %cst_108 = arith.constant dense<0.000000e+00> : vector<16x8xf32>
    %100 = tpu.matmul %97, %99, %cst_108 {dimension_numbers = #tpu.dot_dimension_numbers<[1], [0], [0], [1], [0, 0, 1, 1], [], []>} : vector<16x4xf32>, vector<4x8xf32>, vector<16x8xf32> -> vector<16x8xf32>
    %101 = vector.broadcast %2 : vector<1x8xf32> to vector<16x8xf32>
    %102 = arith.addf %100, %101 : vector<16x8xf32>
    %103 = arith.addf %95, %102 : vector<16x8xf32>
    %cst_109 = arith.constant 0.000000e+00 : f32
    %104 = vector.broadcast %cst_109 : f32 to vector<16x8xf32>
    %105 = arith.maximumf %103, %104 : vector<16x8xf32>
    %c1_110 = arith.constant 1 : index
    %c0_111 = arith.constant 0 : index
    %c0_112 = arith.constant 0 : index
    %106 = vector.load %arg8[%c1_110, %c0_111, %c0_112] : memref<2x16x8xf32, #tpu.memory_space<vmem>>, vector<1x16x8xf32>
    %107 = vector.shape_cast %106 : vector<1x16x8xf32> to vector<16x8xf32>
    %108 = vector.shape_cast %105 : vector<16x8xf32> to vector<1x16x8xf32>
    tpu.vector_store %arg8[%c1_110, %c0_111, %c0_112], %108 {strides = array<i32>} : memref<2x16x8xf32, #tpu.memory_space<vmem>>, vector<1x16x8xf32>,
    return
  }
  func.func @transform_0(%arg0: i32) -> (i32, i32, i32) {
    %c0_i32 = arith.constant 0 : i32
    %c0_i32_0 = arith.constant 0 : i32
    %c0_i32_1 = arith.constant 0 : i32
    %c0_i32_2 = arith.constant 0 : i32
    return %c0_i32, %c0_i32_0, %c0_i32_1 : i32, i32, i32
  }
  func.func @transform_1(%arg0: i32) -> (i32, i32, i32) {
    %c0_i32 = arith.constant 0 : i32
    %c0_i32_0 = arith.constant 0 : i32
    %c0_i32_1 = arith.constant 0 : i32
    %c0_i32_2 = arith.constant 0 : i32
    return %c0_i32, %c0_i32_0, %c0_i32_1 : i32, i32, i32
  }
  func.func @transform_2(%arg0: i32) -> (i32, i32) {
    %c0_i32 = arith.constant 0 : i32
    %c0_i32_0 = arith.constant 0 : i32
    %c0_i32_1 = arith.constant 0 : i32
    return %c0_i32, %c0_i32_0 : i32, i32
  }
  func.func @transform_3(%arg0: i32) -> (i32, i32, i32) {
    %c0_i32 = arith.constant 0 : i32
    %c0_i32_0 = arith.constant 0 : i32
    %c0_i32_1 = arith.constant 0 : i32
    %c0_i32_2 = arith.constant 0 : i32
    return %c0_i32, %c0_i32_0, %c0_i32_1 : i32, i32, i32
  }
  func.func @transform_4(%arg0: i32) -> (i32, i32) {
    %c0_i32 = arith.constant 0 : i32
    %c0_i32_0 = arith.constant 0 : i32
    %c0_i32_1 = arith.constant 0 : i32
    return %c0_i32, %c0_i32_0 : i32, i32
  }
  func.func @transform_5(%arg0: i32) -> (i32, i32, i32) {
    %c0_i32 = arith.constant 0 : i32
    %c0_i32_0 = arith.constant 0 : i32
    %c0_i32_1 = arith.constant 0 : i32
    %c0_i32_2 = arith.constant 0 : i32
    return %c0_i32, %c0_i32_0, %c0_i32_1 : i32, i32, i32
  }
  func.func @transform_6(%arg0: i32) -> (i32, i32) {
    %c0_i32 = arith.constant 0 : i32
    %c0_i32_0 = arith.constant 0 : i32
    %c0_i32_1 = arith.constant 0 : i32
    return %c0_i32, %c0_i32_0 : i32, i32
  }
  func.func @transform_7(%arg0: i32) -> (i32, i32, i32) {
    %c0_i32 = arith.constant 0 : i32
    %c0_i32_0 = arith.constant 0 : i32
    %c0_i32_1 = arith.constant 0 : i32
    %c0_i32_2 = arith.constant 0 : i32
    return %c0_i32, %c0_i32_0, %c0_i32_1 : i32, i32, i32
  }
}

</mosaic_0001>

<llo_original>
// kernel: tpu_custom_call.1
$region0: #{tpu_custom_call.1}
  #allocation0 [shape = 'u32[]', space=smem, size = 0x4, offset = 0x4, fixed_abs, tag = 'smem constant byte address 0x4 - core index']
  #allocation1 [shape = 'u32[144,128]{1,0:T(1,128)}', space=vmem, size = 0x12000, scoped, tag = 'internal scratch']
  #allocation2 [shape = 'f32[18,4]{1,0:T(8,128)}', space=vmem, size = 0x3000, scoped, tag = 'scratch operand']
  #allocation3 [shape = 'f32[17,8]{1,0:T(8,128)}', space=vmem, size = 0x3000, scoped, tag = 'scratch operand']
  %s0 = inlined_call_operand.vmem [shape: f32[2,16,4], index: 0, kind: input, shape index: {}]
  %s1 = inlined_call_operand.vmem [shape: f32[2,4,8], index: 1, kind: input, shape index: {}]
  %s2 = inlined_call_operand.vmem [shape: f32[1,8], index: 2, kind: input, shape index: {}]
  %s3 = inlined_call_operand.vmem [shape: f32[2,8,8], index: 3, kind: input, shape index: {}]
  %s4 = inlined_call_operand.vmem [shape: f32[1,8], index: 4, kind: input, shape index: {}]
  %s5 = inlined_call_operand.vmem [shape: f32[1,4,8], index: 5, kind: input, shape index: {}]
  %s6 = inlined_call_operand.vmem [shape: f32[1,8], index: 6, kind: input, shape index: {}]
  %s7 = inlined_call_operand.vmem [shape: f32[2,16,8], index: 7, kind: output, shape index: {}]
  %s8 = sld [smem:[#allocation0]]
  $region38: #{tpu_custom_call.1} parent=0
    _
  %s10 = ssub.s32 1, %s8
  %s11 = scalar_select 0, %s10, %s8
  // Predicated region
  $region2: #{tpu_custom_call.1} parent=0 // pred_check
    _
  $region3: #{tpu_custom_call.1} parent=0 // pred_check_branch
    %13 = sbr.rel (0) target = $region5
  $region4: #{tpu_custom_call.1} parent=0 // pred_region
    _
  $region5: #{tpu_custom_call.1} parent=0 // pred_fallthru
    _
  // Predicated region
  $region6: #{tpu_custom_call.1} parent=0 // pred_check
    _
  $region7: #{tpu_custom_call.1} parent=0 // pred_check_branch
    %15 = sbr.rel (0) target = $region9
  $region8: #{tpu_custom_call.1} parent=0 // pred_region
    _
  $region9: #{tpu_custom_call.1} parent=0 // pred_fallthru
    _
  // Predicated region
  $region10: #{tpu_custom_call.1} parent=0 // pred_check
    _
  $region11: #{tpu_custom_call.1} parent=0 // pred_check_branch
    %17 = sbr.rel (0) target = $region13
  $region12: #{tpu_custom_call.1} parent=0 // pred_region
    _
  $region13: #{tpu_custom_call.1} parent=0 // pred_fallthru
    _
  // Predicated region
  $region14: #{tpu_custom_call.1} parent=0 // pred_check
    _
  $region15: #{tpu_custom_call.1} parent=0 // pred_check_branch
    %19 = sbr.rel (0) target = $region17
  $region16: #{tpu_custom_call.1} parent=0 // pred_region
    _
  $region17: #{tpu_custom_call.1} parent=0 // pred_fallthru
    _
  // Predicated region
  $region18: #{tpu_custom_call.1} parent=0 // pred_check
    _
  $region19: #{tpu_custom_call.1} parent=0 // pred_check_branch
    %21 = sbr.rel (0) target = $region21
  $region20: #{tpu_custom_call.1} parent=0 // pred_region
    _
  $region21: #{tpu_custom_call.1} parent=0 // pred_fallthru
    _
  // Predicated region
  $region22: #{tpu_custom_call.1} parent=0 // pred_check
    _
  $region23: #{tpu_custom_call.1} parent=0 // pred_check_branch
    %23 = sbr.rel (0) target = $region25
  $region24: #{tpu_custom_call.1} parent=0 // pred_region
    _
  $region25: #{tpu_custom_call.1} parent=0 // pred_fallthru
    _
  // Predicated region
  $region26: #{tpu_custom_call.1} parent=0 // pred_check
    _
  $region27: #{tpu_custom_call.1} parent=0 // pred_check_branch
    %25 = sbr.rel (0) target = $region29
  $region28: #{tpu_custom_call.1} parent=0 // pred_region
    _
  $region29: #{tpu_custom_call.1} parent=0 // pred_fallthru
    _
  %v26 = vld [vmem:[%s2] sm:$0x1]
  %v27 = vld [vmem:[%s4] sm:$0x1]
  %v28 = vld [vmem:[%s6] sm:$0x1]
  %v29 = vld [vmem:[%s0 + $0xf] sm:$0x1]
  %vm30 = vcmask 24576
  %31 = vst.msk [vmem:[#allocation2] sm:$0x1] %vm30, %v29
  %v32 = vld [vmem:[%s0] sm:$0xff]
  %v33 = vld [vmem:[%s0 + $0x8] sm:$0xff]
  %vm34 = vcmask 31744
  %35 = vst.msk [vmem:[#allocation2 + $0x1] sm:$0xff] %vm34, %v32
  %36 = vst.msk [vmem:[#allocation2 + $0x9] sm:$0xff] %vm34, %v33
  %v37 = vld [vmem:[%s0] sm:$0x1]
  %38 = vst.msk [vmem:[#allocation2 + $0x11] sm:$0x1] %vm30, %v37
  %v39 = vld [vmem:[#allocation2] sm:$0xff]
  %v40 = vld [vmem:[#allocation2 + $0x8] sm:$0xff]
  %v41 = vld [vmem:[#allocation2 + $0x10] sm:$0x1]
  %v42 = vld [vmem:[%s1] sm:$0xf]
  %v43 = vld [vmem:[#allocation2 + $0x1] sm:$0xff]
  %v44 = vld [vmem:[#allocation2 + $0x9] sm:$0xff]
  %v45 = vld [vmem:[#allocation2 + $0x11] sm:$0x1]
  %s46 = scalar_lea.vmem %s1, 4
  %v47 = vld [vmem:[%s46] sm:$0xf]
  %v49 = vsel %vm34, %v43, 0
  %v52 = vsel %vm34, %v44, 0
  %v55 = vsel %vm34, %v45, 0
  %vm57 = vcmask 1043456
  %v59 = vsel %vm57, %v47, 0
  %61 = vmatprep.subr.mxu0 0.0
  %62 = vmatpush1.msra.mxu0 %v59
  %63 = vmatprep.subr.mxu0 0.0
  %64 = vmatpush1.msra.mxu0 0.0
  %65 = vmatprep.subr.mxu0 0.0
  %66 = vmatpush1.msra.mxu0 0.0
  %67 = vmatprep.subr.mxu0 0.0
  %68 = vmatpush1.msra.mxu0 0.0
  %69 = vmatprep.subr.mxu0 0.0
  %70 = vmatpush1.msra.mxu0 0.0
  %71 = vmatprep.subr.mxu0 0.0
  %72 = vmatpush1.msra.mxu0 0.0
  %73 = vmatprep.subr.mxu0 0.0
  %74 = vmatpush1.msra.mxu0 0.0
  %75 = vmatprep.subr.mxu0 0.0
  %76 = vmatpush1.msra.mxu0 0.0
  %77 = vmatprep.subr.mxu0 0.0
  %78 = vmatpush1.msra.mxu0 0.0
  %79 = vmatprep.subr.mxu0 0.0
  %80 = vmatpush1.msra.mxu0 0.0
  %81 = vmatprep.subr.mxu0 0.0
  %82 = vmatpush1.msra.mxu0 0.0
  %83 = vmatprep.subr.mxu0 0.0
  %84 = vmatpush1.msra.mxu0 0.0
  %85 = vmatprep.subr.mxu0 0.0
  %86 = vmatpush1.msra.mxu0 0.0
  %87 = vmatprep.subr.mxu0 0.0
  %88 = vmatpush1.msra.mxu0 0.0
  %89 = vmatprep.subr.mxu0 0.0
  %90 = vmatpush1.msra.mxu0 0.0
  %91 = vmatprep.subr.mxu0 0.0
  %92 = vmatpush1.msra.mxu0 0.0
  %93 = vmatprep.subr.mxu0 0.0
  %94 = vmatpush1.msra.mxu0 0.0
  %95 = vmatprep.subr.mxu0 0.0
  %96 = vmatpush1.msra.mxu0 0.0
  %97 = vmatprep.subr.mxu0 0.0
  %98 = vmatpush1.msra.mxu0 0.0
  %99 = vmatprep.subr.mxu0 0.0
  %100 = vmatpush1.msra.mxu0 0.0
  %101 = vmatprep.subr.mxu0 0.0
  %102 = vmatpush1.msra.mxu0 0.0
  %103 = vmatprep.subr.mxu0 0.0
  %104 = vmatpush1.msra.mxu0 0.0
  %105 = vmatprep.subr.mxu0 0.0
  %106 = vmatpush1.msra.mxu0 0.0
  %107 = vmatprep.subr.mxu0 0.0
  %108 = vmatpush1.msra.mxu0 0.0
  %109 = vmatprep.subr.mxu0 0.0
  %110 = vmatpush1.msra.mxu0 0.0
  %111 = vmatprep.subr.mxu0 0.0
  %112 = vmatpush1.msra.mxu0 0.0
  %113 = vmatprep.subr.mxu0 0.0
  %114 = vmatpush1.msra.mxu0 0.0
  %115 = vmatprep.subr.mxu0 0.0
  %116 = vmatpush1.msra.mxu0 0.0
  %117 = vmatprep.subr.mxu0 0.0
  %118 = vmatpush1.msra.mxu0 0.0
  %119 = vmatprep.subr.mxu0 0.0
  %120 = vmatpush1.msra.mxu0 0.0
  %121 = vmatprep.subr.mxu0 0.0
  %122 = vmatpush1.msra.mxu0 0.0
  %123 = vmatprep.subr.mxu0 0.0
  %124 = vmatpush1.msra.mxu0 0.0
  %125 = vmatprep.mubr.f32.mxu0 0.0
  %126 = vmatmul.mubr.f32.gmra.mrb[0].mxu0 %v49
  %v127 = vpop.f32.mrb[0].mxu0
  %v128 = vadd.f32 0.0, %v127
  %v129 = vpop.f32.mrb[0].mxu0
  %130 = vmatprep.mubr.f32.mxu0 0.0
  %131 = vmatmul.mubr.f32.gmra.mrb[0].mxu0 %v52
  %v132 = vpop.f32.mrb[0].mxu0
  %v133 = vadd.f32 0.0, %v132
  %v134 = vpop.f32.mrb[0].mxu0
  %135 = vmatprep.mubr.f32.mxu0 0.0
  %136 = vmatmul.mubr.f32.gmra.mrb[0].mxu0 %v55
  %v137 = vpop.f32.mrb[0].mxu0
  %v138 = vadd.f32 0.0, %v137
  %v139 = vpop.f32.mrb[0].mxu0
  %140 = vdwg.mxu0
  %v142 = vsel %vm34, %v39, 0
  %v145 = vsel %vm34, %v40, 0
  %v148 = vsel %vm34, %v41, 0
  %v151 = vsel %vm57, %v42, 0
  %153 = vmatprep.subr.mxu0 0.0
  %154 = vmatpush1.msra.mxu0 %v151
  %155 = vmatprep.subr.mxu0 0.0
  %156 = vmatpush1.msra.mxu0 0.0
  %157 = vmatprep.subr.mxu0 0.0
  %158 = vmatpush1.msra.mxu0 0.0
  %159 = vmatprep.subr.mxu0 0.0
  %160 = vmatpush1.msra.mxu0 0.0
  %161 = vmatprep.subr.mxu0 0.0
  %162 = vmatpush1.msra.mxu0 0.0
  %163 = vmatprep.subr.mxu0 0.0
  %164 = vmatpush1.msra.mxu0 0.0
  %165 = vmatprep.subr.mxu0 0.0
  %166 = vmatpush1.msra.mxu0 0.0
  %167 = vmatprep.subr.mxu0 0.0
  %168 = vmatpush1.msra.mxu0 0.0
  %169 = vmatprep.subr.mxu0 0.0
  %170 = vmatpush1.msra.mxu0 0.0
  %171 = vmatprep.subr.mxu0 0.0
  %172 = vmatpush1.msra.mxu0 0.0
  %173 = vmatprep.subr.mxu0 0.0
  %174 = vmatpush1.msra.mxu0 0.0
  %175 = vmatprep.subr.mxu0 0.0
  %176 = vmatpush1.msra.mxu0 0.0
  %177 = vmatprep.subr.mxu0 0.0
  %178 = vmatpush1.msra.mxu0 0.0
  %179 = vmatprep.subr.mxu0 0.0
  %180 = vmatpush1.msra.mxu0 0.0
  %181 = vmatprep.subr.mxu0 0.0
  %182 = vmatpush1.msra.mxu0 0.0
  %183 = vmatprep.subr.mxu0 0.0
  %184 = vmatpush1.msra.mxu0 0.0
  %185 = vmatprep.subr.mxu0 0.0
  %186 = vmatpush1.msra.mxu0 0.0
  %187 = vmatprep.subr.mxu0 0.0
  %188 = vmatpush1.msra.mxu0 0.0
  %189 = vmatprep.subr.mxu0 0.0
  %190 = vmatpush1.msra.mxu0 0.0
  %191 = vmatprep.subr.mxu0 0.0
  %192 = vmatpush1.msra.mxu0 0.0
  %193 = vmatprep.subr.mxu0 0.0
  %194 = vmatpush1.msra.mxu0 0.0
  %195 = vmatprep.subr.mxu0 0.0
  %196 = vmatpush1.msra.mxu0 0.0
  %197 = vmatprep.subr.mxu0 0.0
  %198 = vmatpush1.msra.mxu0 0.0
  %199 = vmatprep.subr.mxu0 0.0
  %200 = vmatpush1.msra.mxu0 0.0
  %201 = vmatprep.subr.mxu0 0.0
  %202 = vmatpush1.msra.mxu0 0.0
  %203 = vmatprep.subr.mxu0 0.0
  %204 = vmatpush1.msra.mxu0 0.0
  %205 = vmatprep.subr.mxu0 0.0
  %206 = vmatpush1.msra.mxu0 0.0
  %207 = vmatprep.subr.mxu0 0.0
  %208 = vmatpush1.msra.mxu0 0.0
  %209 = vmatprep.subr.mxu0 0.0
  %210 = vmatpush1.msra.mxu0 0.0
  %211 = vmatprep.subr.mxu0 0.0
  %212 = vmatpush1.msra.mxu0 0.0
  %213 = vmatprep.subr.mxu0 0.0
  %214 = vmatpush1.msra.mxu0 0.0
  %215 = vmatprep.subr.mxu0 0.0
  %216 = vmatpush1.msra.mxu0 0.0
  %217 = vmatprep.mubr.f32.mxu0 0.0
  %218 = vmatmul.mubr.f32.gmra.mrb[0].mxu0 %v142
  %v219 = vpop.f32.mrb[0].mxu0
  %v220 = vadd.f32 %v128, %v219
  %v221 = vpop.f32.mrb[0].mxu0
  %222 = vmatprep.mubr.f32.mxu0 0.0
  %223 = vmatmul.mubr.f32.gmra.mrb[0].mxu0 %v145
  %v224 = vpop.f32.mrb[0].mxu0
  %v225 = vadd.f32 %v133, %v224
  %v226 = vpop.f32.mrb[0].mxu0
  %227 = vmatprep.mubr.f32.mxu0 0.0
  %228 = vmatmul.mubr.f32.gmra.mrb[0].mxu0 %v148
  %v229 = vpop.f32.mrb[0].mxu0
  %v230 = vadd.f32 %v138, %v229
  %v231 = vpop.f32.mrb[0].mxu0
  %232 = vdwg.mxu0
  %v234 = vlaneseq
  %v235 = vshrl.u32 %v234, 7
  %v236 = vsub.s32 0, %v235
  %v237 = vrot.slane %v26, %v236
  %v239 = vadd.f32 %v220, %v237
  %v240 = vadd.f32 %v225, %v237
  %v241 = vadd.f32 %v230, %v237
  %v242 = vmax.f32 %v239, 0.0
  %v243 = vmax.f32 %v240, 0.0
  %v244 = vmax.f32 %v241, 0.0
  %vm245 = vcmask 64512
  %246 = vst.msk [vmem:[#allocation3] sm:$0xff] %vm245, %v242
  %247 = vst.msk [vmem:[#allocation3 + $0x8] sm:$0xff] %vm245, %v243
  %vm248 = vcmask 57344
  %249 = vst.msk [vmem:[#allocation3 + $0x10] sm:$0x1] %vm248, %v244
  %v250 = vld [vmem:[#allocation3] sm:$0xff]
  %v251 = vld [vmem:[#allocation3 + $0x8] sm:$0xff]
  %v252 = vld [vmem:[%s3] sm:$0xff]
  %v253 = vld [vmem:[#allocation3 + $0x1] sm:$0xff]
  %v254 = vld [vmem:[#allocation3 + $0x9] sm:$0xff]
  %s255 = scalar_lea.vmem %s3, 8
  %v256 = vld [vmem:[%s255] sm:$0xff]
  %v258 = vsel %vm245, %v253, 0
  %v261 = vsel %vm245, %v254, 0
  %263 = vmatprep.subr.mxu0 0.0
  %264 = vmatpush1.msra.mxu0 %v256
  %265 = vmatprep.subr.mxu0 0.0
  %266 = vmatpush1.msra.mxu0 0.0
  %267 = vmatprep.subr.mxu0 0.0
  %268 = vmatpush1.msra.mxu0 0.0
  %269 = vmatprep.subr.mxu0 0.0
  %270 = vmatpush1.msra.mxu0 0.0
  %271 = vmatprep.subr.mxu0 0.0
  %272 = vmatpush1.msra.mxu0 0.0
  %273 = vmatprep.subr.mxu0 0.0
  %274 = vmatpush1.msra.mxu0 0.0
  %275 = vmatprep.subr.mxu0 0.0
  %276 = vmatpush1.msra.mxu0 0.0
  %277 = vmatprep.subr.mxu0 0.0
  %278 = vmatpush1.msra.mxu0 0.0
  %279 = vmatprep.subr.mxu0 0.0
  %280 = vmatpush1.msra.mxu0 0.0
  %281 = vmatprep.subr.mxu0 0.0
  %282 = vmatpush1.msra.mxu0 0.0
  %283 = vmatprep.subr.mxu0 0.0
  %284 = vmatpush1.msra.mxu0 0.0
  %285 = vmatprep.subr.mxu0 0.0
  %286 = vmatpush1.msra.mxu0 0.0
  %287 = vmatprep.subr.mxu0 0.0
  %288 = vmatpush1.msra.mxu0 0.0
  %289 = vmatprep.subr.mxu0 0.0
  %290 = vmatpush1.msra.mxu0 0.0
  %291 = vmatprep.subr.mxu0 0.0
  %292 = vmatpush1.msra.mxu0 0.0
  %293 = vmatprep.subr.mxu0 0.0
  %294 = vmatpush1.msra.mxu0 0.0
  %295 = vmatprep.subr.mxu0 0.0
  %296 = vmatpush1.msra.mxu0 0.0
  %297 = vmatprep.subr.mxu0 0.0
  %298 = vmatpush1.msra.mxu0 0.0
  %299 = vmatprep.subr.mxu0 0.0
  %300 = vmatpush1.msra.mxu0 0.0
  %301 = vmatprep.subr.mxu0 0.0
  %302 = vmatpush1.msra.mxu0 0.0
  %303 = vmatprep.subr.mxu0 0.0
  %304 = vmatpush1.msra.mxu0 0.0
  %305 = vmatprep.subr.mxu0 0.0
  %306 = vmatpush1.msra.mxu0 0.0
  %307 = vmatprep.subr.mxu0 0.0
  %308 = vmatpush1.msra.mxu0 0.0
  %309 = vmatprep.subr.mxu0 0.0
  %310 = vmatpush1.msra.mxu0 0.0
  %311 = vmatprep.subr.mxu0 0.0
  %312 = vmatpush1.msra.mxu0 0.0
  %313 = vmatprep.subr.mxu0 0.0
  %314 = vmatpush1.msra.mxu0 0.0
  %315 = vmatprep.subr.mxu0 0.0
  %316 = vmatpush1.msra.mxu0 0.0
  %317 = vmatprep.subr.mxu0 0.0
  %318 = vmatpush1.msra.mxu0 0.0
  %319 = vmatprep.subr.mxu0 0.0
  %320 = vmatpush1.msra.mxu0 0.0
  %321 = vmatprep.subr.mxu0 0.0
  %322 = vmatpush1.msra.mxu0 0.0
  %323 = vmatprep.subr.mxu0 0.0
  %324 = vmatpush1.msra.mxu0 0.0
  %325 = vmatprep.subr.mxu0 0.0
  %326 = vmatpush1.msra.mxu0 0.0
  %327 = vmatprep.mubr.f32.mxu0 0.0
  %328 = vmatmul.mubr.f32.gmra.mrb[0].mxu0 %v258
  %v329 = vpop.f32.mrb[0].mxu0
  %v330 = vadd.f32 0.0, %v329
  %v331 = vpop.f32.mrb[0].mxu0
  %332 = vmatprep.mubr.f32.mxu0 0.0
  %333 = vmatmul.mubr.f32.gmra.mrb[0].mxu0 %v261
  %v334 = vpop.f32.mrb[0].mxu0
  %v335 = vadd.f32 0.0, %v334
  %v336 = vpop.f32.mrb[0].mxu0
  %337 = vdwg.mxu0
  %v339 = vsel %vm245, %v250, 0
  %v342 = vsel %vm245, %v251, 0
  %344 = vmatprep.subr.mxu0 0.0
  %345 = vmatpush1.msra.mxu0 %v252
  %346 = vmatprep.subr.mxu0 0.0
  %347 = vmatpush1.msra.mxu0 0.0
  %348 = vmatprep.subr.mxu0 0.0
  %349 = vmatpush1.msra.mxu0 0.0
  %350 = vmatprep.subr.mxu0 0.0
  %351 = vmatpush1.msra.mxu0 0.0
  %352 = vmatprep.subr.mxu0 0.0
  %353 = vmatpush1.msra.mxu0 0.0
  %354 = vmatprep.subr.mxu0 0.0
  %355 = vmatpush1.msra.mxu0 0.0
  %356 = vmatprep.subr.mxu0 0.0
  %357 = vmatpush1.msra.mxu0 0.0
  %358 = vmatprep.subr.mxu0 0.0
  %359 = vmatpush1.msra.mxu0 0.0
  %360 = vmatprep.subr.mxu0 0.0
  %361 = vmatpush1.msra.mxu0 0.0
  %362 = vmatprep.subr.mxu0 0.0
  %363 = vmatpush1.msra.mxu0 0.0
  %364 = vmatprep.subr.mxu0 0.0
  %365 = vmatpush1.msra.mxu0 0.0
  %366 = vmatprep.subr.mxu0 0.0
  %367 = vmatpush1.msra.mxu0 0.0
  %368 = vmatprep.subr.mxu0 0.0
  %369 = vmatpush1.msra.mxu0 0.0
  %370 = vmatprep.subr.mxu0 0.0
  %371 = vmatpush1.msra.mxu0 0.0
  %372 = vmatprep.subr.mxu0 0.0
  %373 = vmatpush1.msra.mxu0 0.0
  %374 = vmatprep.subr.mxu0 0.0
  %375 = vmatpush1.msra.mxu0 0.0
  %376 = vmatprep.subr.mxu0 0.0
  %377 = vmatpush1.msra.mxu0 0.0
  %378 = vmatprep.subr.mxu0 0.0
  %379 = vmatpush1.msra.mxu0 0.0
  %380 = vmatprep.subr.mxu0 0.0
  %381 = vmatpush1.msra.mxu0 0.0
  %382 = vmatprep.subr.mxu0 0.0
  %383 = vmatpush1.msra.mxu0 0.0
  %384 = vmatprep.subr.mxu0 0.0
  %385 = vmatpush1.msra.mxu0 0.0
  %386 = vmatprep.subr.mxu0 0.0
  %387 = vmatpush1.msra.mxu0 0.0
  %388 = vmatprep.subr.mxu0 0.0
  %389 = vmatpush1.msra.mxu0 0.0
  %390 = vmatprep.subr.mxu0 0.0
  %391 = vmatpush1.msra.mxu0 0.0
  %392 = vmatprep.subr.mxu0 0.0
  %393 = vmatpush1.msra.mxu0 0.0
  %394 = vmatprep.subr.mxu0 0.0
  %395 = vmatpush1.msra.mxu0 0.0
  %396 = vmatprep.subr.mxu0 0.0
  %397 = vmatpush1.msra.mxu0 0.0
  %398 = vmatprep.subr.mxu0 0.0
  %399 = vmatpush1.msra.mxu0 0.0
  %400 = vmatprep.subr.mxu0 0.0
  %401 = vmatpush1.msra.mxu0 0.0
  %402 = vmatprep.subr.mxu0 0.0
  %403 = vmatpush1.msra.mxu0 0.0
  %404 = vmatprep.subr.mxu0 0.0
  %405 = vmatpush1.msra.mxu0 0.0
  %406 = vmatprep.subr.mxu0 0.0
  %407 = vmatpush1.msra.mxu0 0.0
  %408 = vmatprep.mubr.f32.mxu0 0.0
  %409 = vmatmul.mubr.f32.gmra.mrb[0].mxu0 %v339
  %v410 = vpop.f32.mrb[0].mxu0
  %v411 = vadd.f32 %v330, %v410
  %v412 = vpop.f32.mrb[0].mxu0
  %413 = vmatprep.mubr.f32.mxu0 0.0
  %414 = vmatmul.mubr.f32.gmra.mrb[0].mxu0 %v342
  %v415 = vpop.f32.mrb[0].mxu0
  %v416 = vadd.f32 %v335, %v415
  %v417 = vpop.f32.mrb[0].mxu0
  %418 = vdwg.mxu0
  %v420 = vlaneseq
  %v421 = vshrl.u32 %v420, 7
  %v422 = vsub.s32 0, %v421
  %v423 = vrot.slane %v27, %v422
  %v425 = vadd.f32 %v411, %v423
  %v426 = vadd.f32 %v416, %v423
  %v427 = vmax.f32 %v425, 0.0
  %v428 = vmax.f32 %v426, 0.0
  %v429 = vld [vmem:[%s0] sm:$0xff]
  %v430 = vld [vmem:[%s0 + $0x8] sm:$0xff]
  %v431 = vld [vmem:[%s5] sm:$0xf]
  %v433 = vlaneseq
  %v434 = vshrl.u32 %v433, 7
  %v435 = vsub.s32 0, %v434
  %v436 = vrot.slane %v28, %v435
  %v439 = vsel %vm34, %v429, 0
  %v442 = vsel %vm34, %v430, 0
  %v445 = vsel %vm57, %v431, 0
  %447 = vmatprep.subr.mxu0 0.0
  %448 = vmatpush1.msra.mxu0 %v445
  %449 = vmatprep.subr.mxu0 0.0
  %450 = vmatpush1.msra.mxu0 0.0
  %451 = vmatprep.subr.mxu0 0.0
  %452 = vmatpush1.msra.mxu0 0.0
  %453 = vmatprep.subr.mxu0 0.0
  %454 = vmatpush1.msra.mxu0 0.0
  %455 = vmatprep.subr.mxu0 0.0
  %456 = vmatpush1.msra.mxu0 0.0
  %457 = vmatprep.subr.mxu0 0.0
  %458 = vmatpush1.msra.mxu0 0.0
  %459 = vmatprep.subr.mxu0 0.0
  %460 = vmatpush1.msra.mxu0 0.0
  %461 = vmatprep.subr.mxu0 0.0
  %462 = vmatpush1.msra.mxu0 0.0
  %463 = vmatprep.subr.mxu0 0.0
  %464 = vmatpush1.msra.mxu0 0.0
  %465 = vmatprep.subr.mxu0 0.0
  %466 = vmatpush1.msra.mxu0 0.0
  %467 = vmatprep.subr.mxu0 0.0
  %468 = vmatpush1.msra.mxu0 0.0
  %469 = vmatprep.subr.mxu0 0.0
  %470 = vmatpush1.msra.mxu0 0.0
  %471 = vmatprep.subr.mxu0 0.0
  %472 = vmatpush1.msra.mxu0 0.0
  %473 = vmatprep.subr.mxu0 0.0
  %474 = vmatpush1.msra.mxu0 0.0
  %475 = vmatprep.subr.mxu0 0.0
  %476 = vmatpush1.msra.mxu0 0.0
  %477 = vmatprep.subr.mxu0 0.0
  %478 = vmatpush1.msra.mxu0 0.0
  %479 = vmatprep.subr.mxu0 0.0
  %480 = vmatpush1.msra.mxu0 0.0
  %481 = vmatprep.subr.mxu0 0.0
  %482 = vmatpush1.msra.mxu0 0.0
  %483 = vmatprep.subr.mxu0 0.0
  %484 = vmatpush1.msra.mxu0 0.0
  %485 = vmatprep.subr.mxu0 0.0
  %486 = vmatpush1.msra.mxu0 0.0
  %487 = vmatprep.subr.mxu0 0.0
  %488 = vmatpush1.msra.mxu0 0.0
  %489 = vmatprep.subr.mxu0 0.0
  %490 = vmatpush1.msra.mxu0 0.0
  %491 = vmatprep.subr.mxu0 0.0
  %492 = vmatpush1.msra.mxu0 0.0
  %493 = vmatprep.subr.mxu0 0.0
  %494 = vmatpush1.msra.mxu0 0.0
  %495 = vmatprep.subr.mxu0 0.0
  %496 = vmatpush1.msra.mxu0 0.0
  %497 = vmatprep.subr.mxu0 0.0
  %498 = vmatpush1.msra.mxu0 0.0
  %499 = vmatprep.subr.mxu0 0.0
  %500 = vmatpush1.msra.mxu0 0.0
  %501 = vmatprep.subr.mxu0 0.0
  %502 = vmatpush1.msra.mxu0 0.0
  %503 = vmatprep.subr.mxu0 0.0
  %504 = vmatpush1.msra.mxu0 0.0
  %505 = vmatprep.subr.mxu0 0.0
  %506 = vmatpush1.msra.mxu0 0.0
  %507 = vmatprep.subr.mxu0 0.0
  %508 = vmatpush1.msra.mxu0 0.0
  %509 = vmatprep.subr.mxu0 0.0
  %510 = vmatpush1.msra.mxu0 0.0
  %511 = vmatprep.mubr.f32.mxu0 0.0
  %512 = vmatmul.mubr.f32.gmra.mrb[0].mxu0 %v439
  %v513 = vpop.f32.mrb[0].mxu0
  %v514 = vadd.f32 %v436, %v513
  %v515 = vpop.f32.mrb[0].mxu0
  %516 = vmatprep.mubr.f32.mxu0 0.0
  %517 = vmatmul.mubr.f32.gmra.mrb[0].mxu0 %v442
  %v518 = vpop.f32.mrb[0].mxu0
  %v519 = vadd.f32 %v436, %v518
  %v520 = vpop.f32.mrb[0].mxu0
  %521 = vdwg.mxu0
  %v522 = vadd.f32 %v427, %v514
  %v523 = vadd.f32 %v428, %v519
  %v524 = vmax.f32 %v522, 0.0
  %v525 = vmax.f32 %v523, 0.0
  %526 = vst.msk [vmem:[%s7] sm:$0xff] %vm245, %v524
  %527 = vst.msk [vmem:[%s7 + $0x8] sm:$0xff] %vm245, %v525
  %s528 = scalar_lea.vmem %s0, 16
  %v529 = vld [vmem:[%s528 + $0xf] sm:$0x1]
  %530 = vst.msk [vmem:[#allocation2] sm:$0x1] %vm30, %v529
  %v531 = vld [vmem:[%s528] sm:$0xff]
  %v532 = vld [vmem:[%s528 + $0x8] sm:$0xff]
  %533 = vst.msk [vmem:[#allocation2 + $0x1] sm:$0xff] %vm34, %v531
  %534 = vst.msk [vmem:[#allocation2 + $0x9] sm:$0xff] %vm34, %v532
  %v535 = vld [vmem:[%s528] sm:$0x1]
  %536 = vst.msk [vmem:[#allocation2 + $0x11] sm:$0x1] %vm30, %v535
  %v537 = vld [vmem:[#allocation2] sm:$0xff]
  %v538 = vld [vmem:[#allocation2 + $0x8] sm:$0xff]
  %v539 = vld [vmem:[#allocation2 + $0x10] sm:$0x1]
  %v540 = vld [vmem:[%s1] sm:$0xf]
  %v541 = vld [vmem:[#allocation2 + $0x1] sm:$0xff]
  %v542 = vld [vmem:[#allocation2 + $0x9] sm:$0xff]
  %v543 = vld [vmem:[#allocation2 + $0x11] sm:$0x1]
  %v544 = vld [vmem:[%s46] sm:$0xf]
  %v546 = vsel %vm34, %v541, 0
  %v549 = vsel %vm34, %v542, 0
  %v552 = vsel %vm34, %v543, 0
  %v555 = vsel %vm57, %v544, 0
  %557 = vmatprep.subr.mxu0 0.0
  %558 = vmatpush1.msra.mxu0 %v555
  %559 = vmatprep.subr.mxu0 0.0
  %560 = vmatpush1.msra.mxu0 0.0
  %561 = vmatprep.subr.mxu0 0.0
  %562 = vmatpush1.msra.mxu0 0.0
  %563 = vmatprep.subr.mxu0 0.0
  %564 = vmatpush1.msra.mxu0 0.0
  %565 = vmatprep.subr.mxu0 0.0
  %566 = vmatpush1.msra.mxu0 0.0
  %567 = vmatprep.subr.mxu0 0.0
  %568 = vmatpush1.msra.mxu0 0.0
  %569 = vmatprep.subr.mxu0 0.0
  %570 = vmatpush1.msra.mxu0 0.0
  %571 = vmatprep.subr.mxu0 0.0
  %572 = vmatpush1.msra.mxu0 0.0
  %573 = vmatprep.subr.mxu0 0.0
  %574 = vmatpush1.msra.mxu0 0.0
  %575 = vmatprep.subr.mxu0 0.0
  %576 = vmatpush1.msra.mxu0 0.0
  %577 = vmatprep.subr.mxu0 0.0
  %578 = vmatpush1.msra.mxu0 0.0
  %579 = vmatprep.subr.mxu0 0.0
  %580 = vmatpush1.msra.mxu0 0.0
  %581 = vmatprep.subr.mxu0 0.0
  %582 = vmatpush1.msra.mxu0 0.0
  %583 = vmatprep.subr.mxu0 0.0
  %584 = vmatpush1.msra.mxu0 0.0
  %585 = vmatprep.subr.mxu0 0.0
  %586 = vmatpush1.msra.mxu0 0.0
  %587 = vmatprep.subr.mxu0 0.0
  %588 = vmatpush1.msra.mxu0 0.0
  %589 = vmatprep.subr.mxu0 0.0
  %590 = vmatpush1.msra.mxu0 0.0
  %591 = vmatprep.subr.mxu0 0.0
  %592 = vmatpush1.msra.mxu0 0.0
  %593 = vmatprep.subr.mxu0 0.0
  %594 = vmatpush1.msra.mxu0 0.0
  %595 = vmatprep.subr.mxu0 0.0
  %596 = vmatpush1.msra.mxu0 0.0
  %597 = vmatprep.subr.mxu0 0.0
  %598 = vmatpush1.msra.mxu0 0.0
  %599 = vmatprep.subr.mxu0 0.0
  %600 = vmatpush1.msra.mxu0 0.0
  %601 = vmatprep.subr.mxu0 0.0
  %602 = vmatpush1.msra.mxu0 0.0
  %603 = vmatprep.subr.mxu0 0.0
  %604 = vmatpush1.msra.mxu0 0.0
  %605 = vmatprep.subr.mxu0 0.0
  %606 = vmatpush1.msra.mxu0 0.0
  %607 = vmatprep.subr.mxu0 0.0
  %608 = vmatpush1.msra.mxu0 0.0
  %609 = vmatprep.subr.mxu0 0.0
  %610 = vmatpush1.msra.mxu0 0.0
  %611 = vmatprep.subr.mxu0 0.0
  %612 = vmatpush1.msra.mxu0 0.0
  %613 = vmatprep.subr.mxu0 0.0
  %614 = vmatpush1.msra.mxu0 0.0
  %615 = vmatprep.subr.mxu0 0.0
  %616 = vmatpush1.msra.mxu0 0.0
  %617 = vmatprep.subr.mxu0 0.0
  %618 = vmatpush1.msra.mxu0 0.0
  %619 = vmatprep.subr.mxu0 0.0
  %620 = vmatpush1.msra.mxu0 0.0
  %621 = vmatprep.mubr.f32.mxu0 0.0
  %622 = vmatmul.mubr.f32.gmra.mrb[0].mxu0 %v546
  %v623 = vpop.f32.mrb[0].mxu0
  %v624 = vadd.f32 0.0, %v623
  %v625 = vpop.f32.mrb[0].mxu0
  %626 = vmatprep.mubr.f32.mxu0 0.0
  %627 = vmatmul.mubr.f32.gmra.mrb[0].mxu0 %v549
  %v628 = vpop.f32.mrb[0].mxu0
  %v629 = vadd.f32 0.0, %v628
  %v630 = vpop.f32.mrb[0].mxu0
  %631 = vmatprep.mubr.f32.mxu0 0.0
  %632 = vmatmul.mubr.f32.gmra.mrb[0].mxu0 %v552
  %v633 = vpop.f32.mrb[0].mxu0
  %v634 = vadd.f32 0.0, %v633
  %v635 = vpop.f32.mrb[0].mxu0
  %636 = vdwg.mxu0
  %v638 = vsel %vm34, %v537, 0
  %v641 = vsel %vm34, %v538, 0
  %v644 = vsel %vm34, %v539, 0
  %v647 = vsel %vm57, %v540, 0
  %649 = vmatprep.subr.mxu0 0.0
  %650 = vmatpush1.msra.mxu0 %v647
  %651 = vmatprep.subr.mxu0 0.0
  %652 = vmatpush1.msra.mxu0 0.0
  %653 = vmatprep.subr.mxu0 0.0
  %654 = vmatpush1.msra.mxu0 0.0
  %655 = vmatprep.subr.mxu0 0.0
  %656 = vmatpush1.msra.mxu0 0.0
  %657 = vmatprep.subr.mxu0 0.0
  %658 = vmatpush1.msra.mxu0 0.0
  %659 = vmatprep.subr.mxu0 0.0
  %660 = vmatpush1.msra.mxu0 0.0
  %661 = vmatprep.subr.mxu0 0.0
  %662 = vmatpush1.msra.mxu0 0.0
  %663 = vmatprep.subr.mxu0 0.0
  %664 = vmatpush1.msra.mxu0 0.0
  %665 = vmatprep.subr.mxu0 0.0
  %666 = vmatpush1.msra.mxu0 0.0
  %667 = vmatprep.subr.mxu0 0.0
  %668 = vmatpush1.msra.mxu0 0.0
  %669 = vmatprep.subr.mxu0 0.0
  %670 = vmatpush1.msra.mxu0 0.0
  %671 = vmatprep.subr.mxu0 0.0
  %672 = vmatpush1.msra.mxu0 0.0
  %673 = vmatprep.subr.mxu0 0.0
  %674 = vmatpush1.msra.mxu0 0.0
  %675 = vmatprep.subr.mxu0 0.0
  %676 = vmatpush1.msra.mxu0 0.0
  %677 = vmatprep.subr.mxu0 0.0
  %678 = vmatpush1.msra.mxu0 0.0
  %679 = vmatprep.subr.mxu0 0.0
  %680 = vmatpush1.msra.mxu0 0.0
  %681 = vmatprep.subr.mxu0 0.0
  %682 = vmatpush1.msra.mxu0 0.0
  %683 = vmatprep.subr.mxu0 0.0
  %684 = vmatpush1.msra.mxu0 0.0
  %685 = vmatprep.subr.mxu0 0.0
  %686 = vmatpush1.msra.mxu0 0.0
  %687 = vmatprep.subr.mxu0 0.0
  %688 = vmatpush1.msra.mxu0 0.0
  %689 = vmatprep.subr.mxu0 0.0
  %690 = vmatpush1.msra.mxu0 0.0
  %691 = vmatprep.subr.mxu0 0.0
  %692 = vmatpush1.msra.mxu0 0.0
  %693 = vmatprep.subr.mxu0 0.0
  %694 = vmatpush1.msra.mxu0 0.0
  %695 = vmatprep.subr.mxu0 0.0
  %696 = vmatpush1.msra.mxu0 0.0
  %697 = vmatprep.subr.mxu0 0.0
  %698 = vmatpush1.msra.mxu0 0.0
  %699 = vmatprep.subr.mxu0 0.0
  %700 = vmatpush1.msra.mxu0 0.0
  %701 = vmatprep.subr.mxu0 0.0
  %702 = vmatpush1.msra.mxu0 0.0
  %703 = vmatprep.subr.mxu0 0.0
  %704 = vmatpush1.msra.mxu0 0.0
  %705 = vmatprep.subr.mxu0 0.0
  %706 = vmatpush1.msra.mxu0 0.0
  %707 = vmatprep.subr.mxu0 0.0
  %708 = vmatpush1.msra.mxu0 0.0
  %709 = vmatprep.subr.mxu0 0.0
  %710 = vmatpush1.msra.mxu0 0.0
  %711 = vmatprep.subr.mxu0 0.0
  %712 = vmatpush1.msra.mxu0 0.0
  %713 = vmatprep.mubr.f32.mxu0 0.0
  %714 = vmatmul.mubr.f32.gmra.mrb[0].mxu0 %v638
  %v715 = vpop.f32.mrb[0].mxu0
  %v716 = vadd.f32 %v624, %v715
  %v717 = vpop.f32.mrb[0].mxu0
  %718 = vmatprep.mubr.f32.mxu0 0.0
  %719 = vmatmul.mubr.f32.gmra.mrb[0].mxu0 %v641
  %v720 = vpop.f32.mrb[0].mxu0
  %v721 = vadd.f32 %v629, %v720
  %v722 = vpop.f32.mrb[0].mxu0
  %723 = vmatprep.mubr.f32.mxu0 0.0
  %724 = vmatmul.mubr.f32.gmra.mrb[0].mxu0 %v644
  %v725 = vpop.f32.mrb[0].mxu0
  %v726 = vadd.f32 %v634, %v725
  %v727 = vpop.f32.mrb[0].mxu0
  %728 = vdwg.mxu0
  %v729 = vadd.f32 %v716, %v237
  %v730 = vadd.f32 %v721, %v237
  %v731 = vadd.f32 %v726, %v237
  %v732 = vmax.f32 %v729, 0.0
  %v733 = vmax.f32 %v730, 0.0
  %v734 = vmax.f32 %v731, 0.0
  %735 = vst.msk [vmem:[#allocation3] sm:$0xff] %vm245, %v732
  %736 = vst.msk [vmem:[#allocation3 + $0x8] sm:$0xff] %vm245, %v733
  %737 = vst.msk [vmem:[#allocation3 + $0x10] sm:$0x1] %vm248, %v734
  %v738 = vld [vmem:[#allocation3] sm:$0xff]
  %v739 = vld [vmem:[#allocation3 + $0x8] sm:$0xff]
  %v740 = vld [vmem:[%s3] sm:$0xff]
  %v741 = vld [vmem:[#allocation3 + $0x1] sm:$0xff]
  %v742 = vld [vmem:[#allocation3 + $0x9] sm:$0xff]
  %v743 = vld [vmem:[%s255] sm:$0xff]
  %v745 = vsel %vm245, %v741, 0
  %v748 = vsel %vm245, %v742, 0
  %750 = vmatprep.subr.mxu0 0.0
  %751 = vmatpush1.msra.mxu0 %v743
  %752 = vmatprep.subr.mxu0 0.0
  %753 = vmatpush1.msra.mxu0 0.0
  %754 = vmatprep.subr.mxu0 0.0
  %755 = vmatpush1.msra.mxu0 0.0
  %756 = vmatprep.subr.mxu0 0.0
  %757 = vmatpush1.msra.mxu0 0.0
  %758 = vmatprep.subr.mxu0 0.0
  %759 = vmatpush1.msra.mxu0 0.0
  %760 = vmatprep.subr.mxu0 0.0
  %761 = vmatpush1.msra.mxu0 0.0
  %762 = vmatprep.subr.mxu0 0.0
  %763 = vmatpush1.msra.mxu0 0.0
  %764 = vmatprep.subr.mxu0 0.0
  %765 = vmatpush1.msra.mxu0 0.0
  %766 = vmatprep.subr.mxu0 0.0
  %767 = vmatpush1.msra.mxu0 0.0
  %768 = vmatprep.subr.mxu0 0.0
  %769 = vmatpush1.msra.mxu0 0.0
  %770 = vmatprep.subr.mxu0 0.0
  %771 = vmatpush1.msra.mxu0 0.0
  %772 = vmatprep.subr.mxu0 0.0
  %773 = vmatpush1.msra.mxu0 0.0
  %774 = vmatprep.subr.mxu0 0.0
  %775 = vmatpush1.msra.mxu0 0.0
  %776 = vmatprep.subr.mxu0 0.0
  %777 = vmatpush1.msra.mxu0 0.0
  %778 = vmatprep.subr.mxu0 0.0
  %779 = vmatpush1.msra.mxu0 0.0
  %780 = vmatprep.subr.mxu0 0.0
  %781 = vmatpush1.msra.mxu0 0.0
  %782 = vmatprep.subr.mxu0 0.0
  %783 = vmatpush1.msra.mxu0 0.0
  %784 = vmatprep.subr.mxu0 0.0
  %785 = vmatpush1.msra.mxu0 0.0
  %786 = vmatprep.subr.mxu0 0.0
  %787 = vmatpush1.msra.mxu0 0.0
  %788 = vmatprep.subr.mxu0 0.0
  %789 = vmatpush1.msra.mxu0 0.0
  %790 = vmatprep.subr.mxu0 0.0
  %791 = vmatpush1.msra.mxu0 0.0
  %792 = vmatprep.subr.mxu0 0.0
  %793 = vmatpush1.msra.mxu0 0.0
  %794 = vmatprep.subr.mxu0 0.0
  %795 = vmatpush1.msra.mxu0 0.0
  %796 = vmatprep.subr.mxu0 0.0
  %797 = vmatpush1.msra.mxu0 0.0
  %798 = vmatprep.subr.mxu0 0.0
  %799 = vmatpush1.msra.mxu0 0.0
  %800 = vmatprep.subr.mxu0 0.0
  %801 = vmatpush1.msra.mxu0 0.0
  %802 = vmatprep.subr.mxu0 0.0
  %803 = vmatpush1.msra.mxu0 0.0
  %804 = vmatprep.subr.mxu0 0.0
  %805 = vmatpush1.msra.mxu0 0.0
  %806 = vmatprep.subr.mxu0 0.0
  %807 = vmatpush1.msra.mxu0 0.0
  %808 = vmatprep.subr.mxu0 0.0
  %809 = vmatpush1.msra.mxu0 0.0
  %810 = vmatprep.subr.mxu0 0.0
  %811 = vmatpush1.msra.mxu0 0.0
  %812 = vmatprep.subr.mxu0 0.0
  %813 = vmatpush1.msra.mxu0 0.0
  %814 = vmatprep.mubr.f32.mxu0 0.0
  %815 = vmatmul.mubr.f32.gmra.mrb[0].mxu0 %v745
  %v816 = vpop.f32.mrb[0].mxu0
  %v817 = vadd.f32 0.0, %v816
  %v818 = vpop.f32.mrb[0].mxu0
  %819 = vmatprep.mubr.f32.mxu0 0.0
  %820 = vmatmul.mubr.f32.gmra.mrb[0].mxu0 %v748
  %v821 = vpop.f32.mrb[0].mxu0
  %v822 = vadd.f32 0.0, %v821
  %v823 = vpop.f32.mrb[0].mxu0
  %824 = vdwg.mxu0
  %v826 = vsel %vm245, %v738, 0
  %v829 = vsel %vm245, %v739, 0
  %831 = vmatprep.subr.mxu0 0.0
  %832 = vmatpush1.msra.mxu0 %v740
  %833 = vmatprep.subr.mxu0 0.0
  %834 = vmatpush1.msra.mxu0 0.0
  %835 = vmatprep.subr.mxu0 0.0
  %836 = vmatpush1.msra.mxu0 0.0
  %837 = vmatprep.subr.mxu0 0.0
  %838 = vmatpush1.msra.mxu0 0.0
  %839 = vmatprep.subr.mxu0 0.0
  %840 = vmatpush1.msra.mxu0 0.0
  %841 = vmatprep.subr.mxu0 0.0
  %842 = vmatpush1.msra.mxu0 0.0
  %843 = vmatprep.subr.mxu0 0.0
  %844 = vmatpush1.msra.mxu0 0.0
  %845 = vmatprep.subr.mxu0 0.0
  %846 = vmatpush1.msra.mxu0 0.0
  %847 = vmatprep.subr.mxu0 0.0
  %848 = vmatpush1.msra.mxu0 0.0
  %849 = vmatprep.subr.mxu0 0.0
  %850 = vmatpush1.msra.mxu0 0.0
  %851 = vmatprep.subr.mxu0 0.0
  %852 = vmatpush1.msra.mxu0 0.0
  %853 = vmatprep.subr.mxu0 0.0
  %854 = vmatpush1.msra.mxu0 0.0
  %855 = vmatprep.subr.mxu0 0.0
  %856 = vmatpush1.msra.mxu0 0.0
  %857 = vmatprep.subr.mxu0 0.0
  %858 = vmatpush1.msra.mxu0 0.0
  %859 = vmatprep.subr.mxu0 0.0
  %860 = vmatpush1.msra.mxu0 0.0
  %861 = vmatprep.subr.mxu0 0.0
  %862 = vmatpush1.msra.mxu0 0.0
  %863 = vmatprep.subr.mxu0 0.0
  %864 = vmatpush1.msra.mxu0 0.0
  %865 = vmatprep.subr.mxu0 0.0
  %866 = vmatpush1.msra.mxu0 0.0
  %867 = vmatprep.subr.mxu0 0.0
  %868 = vmatpush1.msra.mxu0 0.0
  %869 = vmatprep.subr.mxu0 0.0
  %870 = vmatpush1.msra.mxu0 0.0
  %871 = vmatprep.subr.mxu0 0.0
  %872 = vmatpush1.msra.mxu0 0.0
  %873 = vmatprep.subr.mxu0 0.0
  %874 = vmatpush1.msra.mxu0 0.0
  %875 = vmatprep.subr.mxu0 0.0
  %876 = vmatpush1.msra.mxu0 0.0
  %877 = vmatprep.subr.mxu0 0.0
  %878 = vmatpush1.msra.mxu0 0.0
  %879 = vmatprep.subr.mxu0 0.0
  %880 = vmatpush1.msra.mxu0 0.0
  %881 = vmatprep.subr.mxu0 0.0
  %882 = vmatpush1.msra.mxu0 0.0
  %883 = vmatprep.subr.mxu0 0.0
  %884 = vmatpush1.msra.mxu0 0.0
  %885 = vmatprep.subr.mxu0 0.0
  %886 = vmatpush1.msra.mxu0 0.0
  %887 = vmatprep.subr.mxu0 0.0
  %888 = vmatpush1.msra.mxu0 0.0
  %889 = vmatprep.subr.mxu0 0.0
  %890 = vmatpush1.msra.mxu0 0.0
  %891 = vmatprep.subr.mxu0 0.0
  %892 = vmatpush1.msra.mxu0 0.0
  %893 = vmatprep.subr.mxu0 0.0
  %894 = vmatpush1.msra.mxu0 0.0
  %895 = vmatprep.mubr.f32.mxu0 0.0
  %896 = vmatmul.mubr.f32.gmra.mrb[0].mxu0 %v826
  %v897 = vpop.f32.mrb[0].mxu0
  %v898 = vadd.f32 %v817, %v897
  %v899 = vpop.f32.mrb[0].mxu0
  %900 = vmatprep.mubr.f32.mxu0 0.0
  %901 = vmatmul.mubr.f32.gmra.mrb[0].mxu0 %v829
  %v902 = vpop.f32.mrb[0].mxu0
  %v903 = vadd.f32 %v822, %v902
  %v904 = vpop.f32.mrb[0].mxu0
  %905 = vdwg.mxu0
  %v906 = vadd.f32 %v898, %v423
  %v907 = vadd.f32 %v903, %v423
  %v908 = vmax.f32 %v906, 0.0
  %v909 = vmax.f32 %v907, 0.0
  %v910 = vld [vmem:[%s528] sm:$0xff]
  %v911 = vld [vmem:[%s528 + $0x8] sm:$0xff]
  %v912 = vld [vmem:[%s5] sm:$0xf]
  %v914 = vsel %vm34, %v910, 0
  %v917 = vsel %vm34, %v911, 0
  %v920 = vsel %vm57, %v912, 0
  %922 = vmatprep.subr.mxu0 0.0
  %923 = vmatpush1.msra.mxu0 %v920
  %924 = vmatprep.subr.mxu0 0.0
  %925 = vmatpush1.msra.mxu0 0.0
  %926 = vmatprep.subr.mxu0 0.0
  %927 = vmatpush1.msra.mxu0 0.0
  %928 = vmatprep.subr.mxu0 0.0
  %929 = vmatpush1.msra.mxu0 0.0
  %930 = vmatprep.subr.mxu0 0.0
  %931 = vmatpush1.msra.mxu0 0.0
  %932 = vmatprep.subr.mxu0 0.0
  %933 = vmatpush1.msra.mxu0 0.0
  %934 = vmatprep.subr.mxu0 0.0
  %935 = vmatpush1.msra.mxu0 0.0
  %936 = vmatprep.subr.mxu0 0.0
  %937 = vmatpush1.msra.mxu0 0.0
  %938 = vmatprep.subr.mxu0 0.0
  %939 = vmatpush1.msra.mxu0 0.0
  %940 = vmatprep.subr.mxu0 0.0
  %941 = vmatpush1.msra.mxu0 0.0
  %942 = vmatprep.subr.mxu0 0.0
  %943 = vmatpush1.msra.mxu0 0.0
  %944 = vmatprep.subr.mxu0 0.0
  %945 = vmatpush1.msra.mxu0 0.0
  %946 = vmatprep.subr.mxu0 0.0
  %947 = vmatpush1.msra.mxu0 0.0
  %948 = vmatprep.subr.mxu0 0.0
  %949 = vmatpush1.msra.mxu0 0.0
  %950 = vmatprep.subr.mxu0 0.0
  %951 = vmatpush1.msra.mxu0 0.0
  %952 = vmatprep.subr.mxu0 0.0
  %953 = vmatpush1.msra.mxu0 0.0
  %954 = vmatprep.subr.mxu0 0.0
  %955 = vmatpush1.msra.mxu0 0.0
  %956 = vmatprep.subr.mxu0 0.0
  %957 = vmatpush1.msra.mxu0 0.0
  %958 = vmatprep.subr.mxu0 0.0
  %959 = vmatpush1.msra.mxu0 0.0
  %960 = vmatprep.subr.mxu0 0.0
  %961 = vmatpush1.msra.mxu0 0.0
  %962 = vmatprep.subr.mxu0 0.0
  %963 = vmatpush1.msra.mxu0 0.0
  %964 = vmatprep.subr.mxu0 0.0
  %965 = vmatpush1.msra.mxu0 0.0
  %966 = vmatprep.subr.mxu0 0.0
  %967 = vmatpush1.msra.mxu0 0.0
  %968 = vmatprep.subr.mxu0 0.0
  %969 = vmatpush1.msra.mxu0 0.0
  %970 = vmatprep.subr.mxu0 0.0
  %971 = vmatpush1.msra.mxu0 0.0
  %972 = vmatprep.subr.mxu0 0.0
  %973 = vmatpush1.msra.mxu0 0.0
  %974 = vmatprep.subr.mxu0 0.0
  %975 = vmatpush1.msra.mxu0 0.0
  %976 = vmatprep.subr.mxu0 0.0
  %977 = vmatpush1.msra.mxu0 0.0
  %978 = vmatprep.subr.mxu0 0.0
  %979 = vmatpush1.msra.mxu0 0.0
  %980 = vmatprep.subr.mxu0 0.0
  %981 = vmatpush1.msra.mxu0 0.0
  %982 = vmatprep.subr.mxu0 0.0
  %983 = vmatpush1.msra.mxu0 0.0
  %984 = vmatprep.subr.mxu0 0.0
  %985 = vmatpush1.msra.mxu0 0.0
  %986 = vmatprep.mubr.f32.mxu0 0.0
  %987 = vmatmul.mubr.f32.gmra.mrb[0].mxu0 %v914
  %v988 = vpop.f32.mrb[0].mxu0
  %v989 = vadd.f32 %v436, %v988
  %v990 = vpop.f32.mrb[0].mxu0
  %991 = vmatprep.mubr.f32.mxu0 0.0
  %992 = vmatmul.mubr.f32.gmra.mrb[0].mxu0 %v917
  %v993 = vpop.f32.mrb[0].mxu0
  %v994 = vadd.f32 %v436, %v993
  %v995 = vpop.f32.mrb[0].mxu0
  %996 = vdwg.mxu0
  %v997 = vadd.f32 %v908, %v989
  %v998 = vadd.f32 %v909, %v994
  %v999 = vmax.f32 %v997, 0.0
  %v1000 = vmax.f32 %v998, 0.0
  %s1001 = scalar_lea.vmem %s7, 16
  %1002 = vst.msk [vmem:[%s1001] sm:$0xff] %vm245, %v999
  %1003 = vst.msk [vmem:[%s1001 + $0x8] sm:$0xff] %vm245, %v1000
  // Predicated region
  $region30: #{tpu_custom_call.1} parent=0 // pred_check
    _
  $region31: #{tpu_custom_call.1} parent=0 // pred_check_branch
    %1005 = sbr.rel (0) target = $region33
  $region32: #{tpu_custom_call.1} parent=0 // pred_region
    _
  $region33: #{tpu_custom_call.1} parent=0 // pred_fallthru
    _
  // Predicated region
  $region34: #{tpu_custom_call.1} parent=0 // pred_check
    _
  $region35: #{tpu_custom_call.1} parent=0 // pred_check_branch
    %1007 = sbr.rel (0) target = $region37
  $region36: #{tpu_custom_call.1} parent=0 // pred_region
    _
  $region37: #{tpu_custom_call.1} parent=0 // pred_fallthru
    _

</llo_original>
